<compile_context>
chip_gen: v5e
topology: v5e:2x2
jax: 0.10.0
libtpu: 0.0.40
codegen_flags: <defaults>
</compile_context>

<pallas_src>
import functools

import numpy as np
import jax
import jax.numpy as jnp
from jax import lax
from jax.experimental import pallas as pl
from jax.experimental.pallas import tpu as pltpu


# ----------------------------------------------------------------------------
# helpers
# ----------------------------------------------------------------------------
_DN1 = (((1,), (1,)), ((), ()))   # contract last dim of both operands
_DN0 = (((0,), (0,)), ((), ()))   # contract first dim of both operands
_NEG_EXP_HALF = -0.6065306597126334   # -exp(-0.5)


def _pick_tile(dim, pref, align):
    t = min(pref, dim)
    if t >= dim:
        return dim
    t = (t // align) * align
    while t > 0 and dim % t != 0:
        t -= align
    return t if t > 0 else dim


# ----------------------------------------------------------------------------
# RMSNorm (row-tiled)
# ----------------------------------------------------------------------------
def _rmsnorm_kernel(x_ref, w_ref, o_ref, *, eps):
    x = x_ref[...].astype(jnp.float32)
    var = jnp.mean(x * x, axis=-1, keepdims=True)
    y = x * lax.rsqrt(var + eps)
    o_ref[...] = (y * w_ref[...].astype(jnp.float32)).astype(o_ref.dtype)


def rmsnorm(x, w, eps=1e-6, tm=512):
    M, D = x.shape
    tm = _pick_tile(M, tm, 8)
    row = pl.BlockSpec((tm, D), lambda i: (i, 0))
    return pl.pallas_call(
        functools.partial(_rmsnorm_kernel, eps=eps),
        out_shape=jax.ShapeDtypeStruct((M, D), x.dtype),
        grid=(M // tm,),
        in_specs=[row, pl.BlockSpec((1, D), lambda i: (0, 0))],
        out_specs=row,
        compiler_params=pltpu.CompilerParams(
            dimension_semantics=("parallel",)),
    )(x, w)


# ----------------------------------------------------------------------------
# Tiled GEMM: x[M,K] @ w_t[K,N]  (weights pre-transposed once at load time)
# ----------------------------------------------------------------------------
def _linear_kernel(x_ref, w_ref, o_ref, acc_ref):
    @pl.when(pl.program_id(2) == 0)
    def _():
        acc_ref[...] = jnp.zeros_like(acc_ref)

    acc_ref[...] += jnp.dot(x_ref[...], w_ref[...],
                            preferred_element_type=jnp.float32)

    @pl.when(pl.program_id(2) == pl.num_programs(2) - 1)
    def _():
        o_ref[...] = acc_ref[...].astype(o_ref.dtype)


def linear(x, w_t, out_dtype=None, tm=512, tn=512, tk=1024):
    M, K = x.shape
    K2, N = w_t.shape
    assert K == K2
    out_dtype = out_dtype or x.dtype
    tm = _pick_tile(M, tm, 8)
    tn = _pick_tile(N, tn, 128)
    tk = _pick_tile(K, tk, 128)
    return pl.pallas_call(
        _linear_kernel,
        out_shape=jax.ShapeDtypeStruct((M, N), out_dtype),
        grid=(M // tm, N // tn, K // tk),
        in_specs=[pl.BlockSpec((tm, tk), lambda i, j, k: (i, k)),
                  pl.BlockSpec((tk, tn), lambda i, j, k: (k, j))],
        out_specs=pl.BlockSpec((tm, tn), lambda i, j, k: (i, j)),
        scratch_shapes=[pltpu.VMEM((tm, tn), jnp.float32)],
        compiler_params=pltpu.CompilerParams(
            dimension_semantics=("parallel", "parallel", "arbitrary")),
    )(x, w_t)


# ----------------------------------------------------------------------------
# MLP: fused gate/up (silu(g)*u) + tiled down projection
# ----------------------------------------------------------------------------
def _gate_up_kernel(x_ref, wg_ref, wu_ref, h_ref, accg_ref, accu_ref):
    k = pl.program_id(2)

    @pl.when(k == 0)
    def _():
        accg_ref[...] = jnp.zeros_like(accg_ref)
        accu_ref[...] = jnp.zeros_like(accu_ref)

    accg_ref[...] += jnp.dot(x_ref[...], wg_ref[...],
                             preferred_element_type=jnp.float32)
    accu_ref[...] += jnp.dot(x_ref[...], wu_ref[...],
                             preferred_element_type=jnp.float32)

    @pl.when(k == pl.num_programs(2) - 1)
    def _():
        g = accg_ref[...]
        h_ref[...] = (g * jax.nn.sigmoid(g) * accu_ref[...]).astype(h_ref.dtype)


def mlp(x, w_gate_t, w_up_t, w_down_t, tm=512, tn=512, tk=512):
    M, D = x.shape
    F = w_gate_t.shape[1]
    tm_ = _pick_tile(M, tm, 8)
    tn_ = _pick_tile(F, tn, 128)
    tk_ = _pick_tile(D, tk, 128)
    h = pl.pallas_call(
        _gate_up_kernel,
        out_shape=jax.ShapeDtypeStruct((M, F), x.dtype),
        grid=(M // tm_, F // tn_, D // tk_),
        in_specs=[pl.BlockSpec((tm_, tk_), lambda i, j, k: (i, k)),
                  pl.BlockSpec((tk_, tn_), lambda i, j, k: (k, j)),
                  pl.BlockSpec((tk_, tn_), lambda i, j, k: (k, j))],
        out_specs=pl.BlockSpec((tm_, tn_), lambda i, j, k: (i, j)),
        scratch_shapes=[pltpu.VMEM((tm_, tn_), jnp.float32),
                        pltpu.VMEM((tm_, tn_), jnp.float32)],
        compiler_params=pltpu.CompilerParams(
            dimension_semantics=("parallel", "parallel", "arbitrary")),
    )(x, w_gate_t, w_up_t)
    # TODO(synk): fuse the down projection so the [M,F] intermediate never
    # round-trips HBM (nested pipeline over F); kept separate for now.
    return linear(h, w_down_t, out_dtype=x.dtype, tm=tm, tn=tn, tk=1024)


# ----------------------------------------------------------------------------
# Time-mix prep: token-shift lerps + fused w/a/v/g LoRAs, one pass over rows
# ----------------------------------------------------------------------------
def _tmix_prep_kernel(x_ref, xp_ref, mu_ref, bias_ref, w1c_ref, w1cm_ref,
                      w2_ref, a2_ref, v2_ref, g2_ref,
                      xr_ref, xk_ref, xv_ref, lw_ref, iclr_ref, vgate_ref,
                      g_ref):
    f32 = jnp.float32
    bf = x_ref.dtype
    x = x_ref[...].astype(f32)
    dx = xp_ref[...].astype(f32) - x
    mu = mu_ref[...].astype(f32)       # [6, D]: x_r, x_w, x_k, x_v, x_a, x_g
    bias = bias_ref[...].astype(f32)   # [3, D]: w0, a0, v0

    xr_ref[...] = (x + dx * mu[0:1, :]).astype(xr_ref.dtype)
    xk_ref[...] = (x + dx * mu[2:3, :]).astype(xk_ref.dtype)
    xv_ref[...] = (x + dx * mu[3:4, :]).astype(xv_ref.dtype)

    # Fused LoRA up-projection (w|a|v|g in 32-wide lane slots):
    #   (x + dx*mu_i) @ W1_i == x @ W1_i + dx @ (diag(mu_i) W1_i)
    h = (jnp.dot(x_ref[...], w1c_ref[...], preferred_element_type=f32)
         + jnp.dot(dx.astype(bf), w1cm_ref[...], preferred_element_type=f32))
    h_w = jnp.tanh(h[:, 0:32]).astype(bf)
    h_a = h[:, 32:64].astype(bf)
    h_v = h[:, 64:96].astype(bf)
    h_g = jax.nn.sigmoid(h[:, 96:128]).astype(bf)

    # log-decay:  -exp(-softplus(-(w0+lora)) - 0.5) == -exp(-0.5)*sigmoid(w0+lora)
    lw_pre = bias[0:1, :] + jnp.dot(h_w, w2_ref[...],
                                    preferred_element_type=f32)
    lw_ref[...] = (_NEG_EXP_HALF * jax.nn.sigmoid(lw_pre)).astype(lw_ref.dtype)
    iclr_ref[...] = jax.nn.sigmoid(
        bias[1:2, :] + jnp.dot(h_a, a2_ref[...], preferred_element_type=f32)
    ).astype(iclr_ref.dtype)
    vgate_ref[...] = jax.nn.sigmoid(
        bias[2:3, :] + jnp.dot(h_v, v2_ref[...], preferred_element_type=f32)
    ).astype(vgate_ref.dtype)
    g_ref[...] = jnp.dot(h_g, g2_ref[...],
                         preferred_element_type=f32).astype(g_ref.dtype)


def tmix_prep(x, xprev, p, tm=512):
    M, D = x.shape
    tm = _pick_tile(M, tm, 8)
    row = pl.BlockSpec((tm, D), lambda i: (i, 0))
    full = lambda arr: pl.BlockSpec(arr.shape, lambda i: (0, 0))
    outs = (jax.ShapeDtypeStruct((M, D), jnp.bfloat16),  # xr
            jax.ShapeDtypeStruct((M, D), jnp.bfloat16),  # xk
            jax.ShapeDtypeStruct((M, D), jnp.bfloat16),  # xv
            jax.ShapeDtypeStruct((M, D), jnp.float32),   # lw  (log decay)
            jax.ShapeDtypeStruct((M, D), jnp.bfloat16),  # iclr (a-gate)
            jax.ShapeDtypeStruct((M, D), jnp.bfloat16),  # v residual gate
            jax.ShapeDtypeStruct((M, D), jnp.bfloat16))  # g
    return pl.pallas_call(
        _tmix_prep_kernel,
        out_shape=outs,
        grid=(M // tm,),
        in_specs=[row, row, full(p['mu']), full(p['bias']),
                  full(p['W1cat']), full(p['W1cat_mu']),
                  full(p['w2']), full(p['a2']), full(p['v2']), full(p['g2'])],
        out_specs=(row,) * 7,
        compiler_params=pltpu.CompilerParams(
            dimension_semantics=("parallel",)),
    )(x, xprev, p['mu'], p['bias'], p['W1cat'], p['W1cat_mu'],
      p['w2'], p['a2'], p['v2'], p['g2'])


# ----------------------------------------------------------------------------
# Post-k fusion: kk normalize, a=-kk, b=kk*iclr, k_mod, v residual mix
# (per-head reductions via one-hot head-map matmul)
# ----------------------------------------------------------------------------
def _tmix_postk_kernel(k_ref, v_ref, vf_ref, iclr_ref, vgate_ref,
                       kkw_ref, kaw_ref, hmap_ref,
                       a_ref, b_ref, km_ref, vm_ref):
    f32 = jnp.float32
    k = k_ref[...].astype(f32)
    iclr = iclr_ref[...].astype(f32)
    hmap = hmap_ref[...].astype(f32)                                  # [D, H]
    kk = k * kkw_ref[...].astype(f32)
    ss = jnp.dot(kk * kk, hmap, preferred_element_type=f32)           # [tm, H]
    inv = lax.rsqrt(jnp.maximum(ss, 1e-24))
    inv_b = lax.dot_general(inv, hmap, _DN1, preferred_element_type=f32)
    kk = kk * inv_b
    a_ref[...] = (-kk).astype(a_ref.dtype)
    b_ref[...] = (kk * iclr).astype(b_ref.dtype)
    km_ref[...] = (k * (1.0 + (iclr - 1.0) * kaw_ref[...].astype(f32))
                   ).astype(km_ref.dtype)
    v = v_ref[...].astype(f32)
    vm = v + (vf_ref[...].astype(f32) - v) * vgate_ref[...].astype(f32)
    vm_ref[...] = vm.astype(vm_ref.dtype)


def tmix_post_k(k, v, v_first, iclr, vgate, p, tm=512):
    M, D = k.shape
    tm = _pick_tile(M, tm, 8)
    row = pl.BlockSpec((tm, D), lambda i: (i, 0))
    vec = pl.BlockSpec((1, D), lambda i: (0, 0))
    hm = pl.BlockSpec(p['head_map'].shape, lambda i: (0, 0))
    outs = tuple(jax.ShapeDtypeStruct((M, D), jnp.bfloat16) for _ in range(4))
    return pl.pallas_call(
        _tmix_postk_kernel,
        out_shape=outs,
        grid=(M // tm,),
        in_specs=[row, row, row, row, row, vec, vec, hm],
        out_specs=(row,) * 4,
        compiler_params=pltpu.CompilerParams(
            dimension_semantics=("parallel",)),
    )(k, v, v_first, iclr, vgate, p['k_k'], p['k_a'], p['head_map'])


# ----------------------------------------------------------------------------
# Post-WKV fusion: per-head group-norm + r*k*r_k bonus + gating
# ----------------------------------------------------------------------------
def _tmix_postwkv_kernel(o_ref, r_ref, km_ref, vm_ref, g_ref,
                         lnw_ref, lnb_ref, rk_ref, hmap_ref, y_ref,
                         *, head_size, eps):
    f32 = jnp.float32
    o = o_ref[...].astype(f32)
    hmap = hmap_ref[...].astype(f32)
    inv_c = 1.0 / head_size
    mean = jnp.dot(o, hmap, preferred_element_type=f32) * inv_c       # [tm,H]
    m2 = jnp.dot(o * o, hmap, preferred_element_type=f32) * inv_c
    var = jnp.maximum(m2 - mean * mean, 0.0)
    istd = lax.rsqrt(var + eps)
    mean_b = lax.dot_general(mean, hmap, _DN1, preferred_element_type=f32)
    istd_b = lax.dot_general(istd, hmap, _DN1, preferred_element_type=f32)
    gn = ((o - mean_b) * istd_b * lnw_ref[...].astype(f32)
          + lnb_ref[...].astype(f32))
    r = r_ref[...].astype(f32)
    km = km_ref[...].astype(f32)
    vm = vm_ref[...].astype(f32)
    rk = jnp.dot(r * km * rk_ref[...].astype(f32), hmap,
                 preferred_element_type=f32)                          # [tm,H]
    bonus = lax.dot_general(rk, hmap, _DN1, preferred_element_type=f32) * vm
    y_ref[...] = ((gn + bonus) * g_ref[...].astype(f32)).astype(y_ref.dtype)


def tmix_post_wkv(o, r, k_mod, v_mod, g, p, head_size, tm=512, eps=64e-5):
    # TODO(synk): eps=64e-5 assumes RWKV-7 default head_size_divisor=8.
    M, D = o.shape
    tm = _pick_tile(M, tm, 8)
    row = pl.BlockSpec((tm, D), lambda i: (i, 0))
    vec = pl.BlockSpec((1, D), lambda i: (0, 0))
    hm = pl.BlockSpec(p['head_map'].shape, lambda i: (0, 0))
    return pl.pallas_call(
        functools.partial(_tmix_postwkv_kernel, head_size=head_size, eps=eps),
        out_shape=jax.ShapeDtypeStruct((M, D), jnp.bfloat16),
        grid=(M // tm,),
        in_specs=[row, row, row, row, row, vec, vec, vec, hm],
        out_specs=row,
        compiler_params=pltpu.CompilerParams(
            dimension_semantics=("parallel",)),
    )(o, r, k_mod, v_mod, g, p['lnx_w'], p['lnx_b'], p['r_k'], p['head_map'])


# ----------------------------------------------------------------------------
# Chunked WKV-7 recurrence (delta-rule / UT-transform formulation)
#   S_t = diag(w_t) S_{t-1} + b_t (a_t^T S_{t-1}) + k_t v_t^T ,  o_t = r_t^T S_t
# The state is carried TRANSPOSED as St = S^T with shape [C_value, C_key] so
# the per-chunk decay is a lane-wise elementwise scale (no diag matmul), and it
# stays resident in the output block across the (arbitrary) time-chunk axis.
# Intra-chunk matmuls use bf16 operands (f32 accumulation); state dots stay f32.
# ----------------------------------------------------------------------------
def _wkv7_chunk_kernel(r_ref, lw_ref, k_ref, v_ref, a_ref, b_ref, s0_ref,
                       o_ref, sT_ref, *, n_iters):
    f32, bf16 = jnp.float32, jnp.bfloat16

    @pl.when(pl.program_id(2) == 0)
    def _():
        sT_ref[...] = s0_ref[...]

    Lc = r_ref.shape[1]
    r = r_ref[0].astype(f32)
    lw = lw_ref[0]                       # [Lc, C] f32 log-decay (<= 0)
    k = k_ref[0].astype(f32)
    v_b = v_ref[0]                       # bf16, used directly as MXU operand
    a = a_ref[0].astype(f32)
    b = b_ref[0].astype(f32)
    St0 = sT_ref[0, 0]                   # [C_value, C_key] f32 running state

    row = lax.broadcasted_iota(jnp.int32, (Lc, Lc), 0)
    col = lax.broadcasted_iota(jnp.int32, (Lc, Lc), 1)
    strict = (col < row).astype(f32)
    incl = (col <= row).astype(f32)
    eye = (col == row).astype(f32)

    # inclusive in-chunk cumulative log-decay via a triangular-ones matmul
    cs_inc = jnp.dot(incl, lw, preferred_element_type=f32)       # [Lc, C]
    total = cs_inc[Lc - 1:Lc, :]                                 # [1, C]
    c_inc = jnp.exp(cs_inc)                      # prod_{s<=t} w_s
    c_exc = jnp.exp(cs_inc - lw)                 # prod_{s<t}  w_s
    c_inv = pl.reciprocal(c_inc, approx=True)
    d_tot = jnp.exp(total)                       # prod over whole chunk
    c_rem = d_tot * c_inv                        # prod_{s>t}  w_s

    a_t = a * c_exc
    r_t = r * c_inc
    b_t = b * c_inv
    k_t = k * c_inv
    a_b = a_t.astype(bf16)
    r_b = r_t.astype(bf16)
    b_b = b_t.astype(bf16)
    k_b = k_t.astype(bf16)

    m_ab = strict * lax.dot_general(a_b, b_b, _DN1, preferred_element_type=f32)
    m_ak = strict * lax.dot_general(a_b, k_b, _DN1, preferred_element_type=f32)
    m_rb = incl * lax.dot_general(r_b, b_b, _DN1, preferred_element_type=f32)
    m_rk = incl * lax.dot_general(r_b, k_b, _DN1, preferred_element_type=f32)

    # (I - m_ab)^{-1} = sum_j m_ab^j  (strictly lower triangular -> nilpotent)
    inv = eye + m_ab
    p = m_ab.astype(bf16)
    for _ in range(n_iters):
        p2 = jnp.dot(p, p, preferred_element_type=f32)
        inv = inv + jnp.dot(p2.astype(bf16), inv.astype(bf16),
                            preferred_element_type=f32)
        p = p2.astype(bf16)

    # in-chunk "removed state" rows (a_t reads the f32 carried state)
    rhs = (lax.dot_general(a_t, St0, _DN1, preferred_element_type=f32)
           + jnp.dot(m_ak.astype(bf16), v_b, preferred_element_type=f32))
    sa = jnp.dot(inv.astype(bf16), rhs.astype(bf16),
                 preferred_element_type=f32)                     # [Lc, C_v]

    o = (lax.dot_general(r_b, St0.astype(bf16), _DN1,
                         preferred_element_type=f32)
         + jnp.dot(m_rb.astype(bf16), sa.astype(bf16),
                   preferred_element_type=f32)
         + jnp.dot(m_rk.astype(bf16), v_b, preferred_element_type=f32))
    o_ref[0] = o.astype(o_ref.dtype)             # lane-dense [Lc, C_v] bf16

    # State update (f32): St_new = St0*d_tot + sa^T(b*c_rem) + v^T(k*c_rem)
    bw = b * c_rem
    kw = k * c_rem
    s_new = (St0 * d_tot
             + lax.dot_general(sa, bw, _DN0, preferred_element_type=f32)
             + lax.dot_general(v_b.astype(f32), kw, _DN0,
                               preferred_element_type=f32))
    sT_ref[0, 0] = s_new


def wkv7_chunked(r, lw, k, v, a, b, state_vk, n_heads, head_size, chunk=64):
    # r/lw/k/v/a/b: [B, T, H*C]; state_vk: [B, H, C_value, C_key], f32
    B, T, D = r.shape
    H, C = n_heads, head_size
    assert D == H * C
    # TODO(synk): head-sliced BlockSpec needs head_size % 128 == 0 (or H == 1);
    # for head_size 64 with many heads, group two heads per block instead.
    assert C % 128 == 0 or H == 1
    Lc = _pick_tile(T, chunk, 16)
    NT = T // Lc
    n_iters = max(int(np.ceil(np.log2(max(Lc, 2)))) - 1, 0)
    seq_spec = pl.BlockSpec((1, Lc, C), lambda bi, hi, ti: (bi, ti, hi))
    st_spec = pl.BlockSpec((1, 1, C, C), lambda bi, hi, ti: (bi, hi, 0, 0))
    # TODO(synk): on v7x with B*H < 2 parallel blocks, add another parallel
    # axis (e.g. split the value dim) so both TensorCores get work.
    o, s_out = pl.pallas_call(
        functools.partial(_wkv7_chunk_kernel, n_iters=n_iters),
        out_shape=(jax.ShapeDtypeStruct((B, T, D), jnp.bfloat16),
                   jax.ShapeDtypeStruct((B, H, C, C), jnp.float32)),
        grid=(B, H, NT),
        in_specs=[seq_spec] * 6 + [st_spec],
        out_specs=(seq_spec, st_spec),
        compiler_params=pltpu.CompilerParams(
            dimension_semantics=("parallel", "parallel", "arbitrary")),
    )(r, lw, k, v, a, b, state_vk)
    return o, s_out


# ----------------------------------------------------------------------------
# Qwerky7 time-mix + layer block
# ----------------------------------------------------------------------------
def qwerky7_time_mix(p, x, wkv_state, v_first, n_heads, head_size,
                     layer_id=1, chunk=64):
    B, T, D = x.shape
    M = B * T
    x2 = x.reshape(M, D)
    xprev = jnp.concatenate([jnp.zeros_like(x[:, :1]), x[:, :-1]],
                            axis=1).reshape(M, D)

    xr, xk, xv, lw, iclr, vgate, g = tmix_prep(x2, xprev, p)
    r = linear(xr, p['Wr_t'], jnp.bfloat16)
    k = linear(xk, p['Wk_t'], jnp.bfloat16)
    v = linear(xv, p['Wv_t'], jnp.bfloat16)

    vf = v if layer_id == 0 else v_first.astype(jnp.bfloat16).reshape(M, D)
    a_in, b_in, k_mod, v_mod = tmix_post_k(k, v, vf, iclr, vgate, p)

    to_seq = lambda t: t.reshape(B, T, D)
    o, s_out = wkv7_chunked(to_seq(r), to_seq(lw), to_seq(k_mod),
                            to_seq(v_mod), to_seq(a_in), to_seq(b_in),
                            wkv_state.astype(jnp.float32),
                            n_heads, head_size, chunk)

    y = tmix_post_wkv(o.reshape(M, D), r, k_mod, v_mod, g, p, head_size)
    att = linear(y, p['Wo_t'], jnp.bfloat16)

    v_first_out = v.reshape(B, T, D) if layer_id == 0 else v_first
    return att.reshape(B, T, D), s_out, v_first_out


def qwerky7_layer_block(p, x, last_wkv_state, v_first, *,
                        n_heads, head_size, rms_eps=1e-6, layer_id=1):
    B, T, D = x.shape
    M = B * T
    xn = rmsnorm(x.reshape(M, D), p['ln1_w'], rms_eps).reshape(B, T, D)
    att_out, tmix_wkv, v_first = qwerky7_time_mix(
        p, xn, last_wkv_state, v_first, n_heads, head_size, layer_id=layer_id)
    x = (x + att_out).astype(jnp.bfloat16)                # drop0 = Identity
    xn2 = rmsnorm(x.reshape(M, D), p['ln2_w'], rms_eps)
    mlp_out = mlp(xn2, p['Wgate_t'], p['Wup_t'], p['Wdown_t']).reshape(B, T, D)
    x = (x + mlp_out).astype(jnp.bfloat16)                # drop1 = Identity
    return x, tmix_wkv, v_first


# ----------------------------------------------------------------------------
# Sequential (per-step) WKV-7 reference, pure JAX — used only for verification
# (state here is key x value; the kernel carries value x key)
# ----------------------------------------------------------------------------
def wkv7_sequential_ref(r, lw, k, v, a, b, s0):
    w = jnp.exp(lw)

    def step(S, ts):
        r_t, w_t, k_t, v_t, a_t, b_t = ts
        sa = jnp.einsum('bhk,bhkv->bhv', a_t, S)
        S = (S * w_t[..., None] + b_t[..., None] * sa[:, :, None, :]
             + k_t[..., None] * v_t[:, :, None, :])
        o = jnp.einsum('bhk,bhkv->bhv', r_t, S)
        return S, o

    xs = tuple(jnp.moveaxis(t, 1, 0) for t in (r, w, k, v, a, b))
    s_last, outs = lax.scan(step, s0, xs)
    return jnp.moveaxis(outs, 0, 1), s_last


# ----------------------------------------------------------------------------
# Deterministic synthetic parameters (shapes per the module __init__)
# Weights are stored pre-transposed ([in, out]) / LoRAs pre-fused — a one-time
# parameter-load transform, not per-call work.
# ----------------------------------------------------------------------------
def init_params(key, D, H, C, F, w_lora=32, a_lora=32, v_lora=16, g_lora=32):
    assert max(w_lora, a_lora, v_lora, g_lora) <= 32   # 32-wide fused slots
    ks = iter(jax.random.split(key, 40))

    def nrm(shape, scale=0.02, dtype=jnp.float32):
        return (jax.random.normal(next(ks), shape, jnp.float32) * scale
                ).astype(dtype)

    def uni(shape, lo, hi):
        return jax.random.uniform(next(ks), shape, jnp.float32, lo, hi)

    def pad_cols(w):
        return jnp.pad(w, ((0, 0), (0, 32 - w.shape[1])))

    def pad_rows(w):
        return jnp.pad(w, ((0, 32 - w.shape[0]), (0, 0)))

    p = {}
    p['ln1_w'] = jnp.ones((1, D), jnp.bfloat16)
    p['ln2_w'] = jnp.ones((1, D), jnp.bfloat16)
    mu = uni((6, D), 0.0, 1.0)                    # x_r, x_w, x_k, x_v, x_a, x_g
    p['mu'] = mu
    w0 = uni((1, D), -2.0, -1.0)
    a0 = jnp.zeros((1, D), jnp.float32)
    v0 = jnp.ones((1, D), jnp.float32)
    p['bias'] = jnp.concatenate([w0, a0, v0], axis=0)  # [3, D]

    w1 = nrm((D, w_lora)); w2 = nrm((w_lora, D))
    a1 = nrm((D, a_lora)); a2 = nrm((a_lora, D))
    v1 = nrm((D, v_lora)); v2 = nrm((v_lora, D))
    g1 = nrm((D, g_lora)); g2 = nrm((g_lora, D))
    up = [pad_cols(w1), pad_cols(a1), pad_cols(v1), pad_cols(g1)]
    up_mu = [pad_cols(w1) * mu[1][:, None], pad_cols(a1) * mu[4][:, None],
             pad_cols(v1) * mu[3][:, None], pad_cols(g1) * mu[5][:, None]]
    p['W1cat'] = jnp.concatenate(up, axis=1).astype(jnp.bfloat16)        # [D,128]
    p['W1cat_mu'] = jnp.concatenate(up_mu, axis=1).astype(jnp.bfloat16)  # [D,128]
    p['w2'] = pad_rows(w2).astype(jnp.bfloat16)
    p['a2'] = pad_rows(a2).astype(jnp.bfloat16)
    p['v2'] = pad_rows(v2).astype(jnp.bfloat16)
    p['g2'] = pad_rows(g2).astype(jnp.bfloat16)

    p['k_k'] = jnp.full((1, D), 0.85, jnp.float32)
    p['k_a'] = jnp.ones((1, D), jnp.float32)
    p['r_k'] = nrm((1, D))
    p['lnx_w'] = jnp.ones((1, D), jnp.float32)
    p['lnx_b'] = jnp.zeros((1, D), jnp.float32)
    # projection weights stored as [in, out] (== torch weight.T, done once)
    p['Wr_t'] = nrm((D, D), dtype=jnp.bfloat16)
    p['Wk_t'] = nrm((D, D), dtype=jnp.bfloat16)
    p['Wv_t'] = nrm((D, D), dtype=jnp.bfloat16)
    p['Wo_t'] = nrm((D, D), dtype=jnp.bfloat16)
    p['Wgate_t'] = nrm((D, F), dtype=jnp.bfloat16)
    p['Wup_t'] = nrm((D, F), dtype=jnp.bfloat16)
    p['Wdown_t'] = nrm((F, D), dtype=jnp.bfloat16)
    hm = (np.arange(D)[:, None] // C == np.arange(H)[None, :]).astype(np.float32)
    p['head_map'] = jnp.asarray(hm)                    # one-hot head map [D, H]
    return p


if __name__ == "__main__":
    B, T = 2, 128
    H, C = 2, 128
    D = H * C            # 256
    F = 512              # hidden_size_ffn

    params = init_params(jax.random.PRNGKey(0), D, H, C, F)
    k_in, k_vf, k_chk = jax.random.split(jax.random.PRNGKey(0), 3)
    x = jax.random.normal(k_in, (B, T, D), jnp.float32).astype(jnp.bfloat16)
    v_first = jax.random.normal(k_vf, (B, T, D), jnp.float32).astype(jnp.bfloat16)
    last_wkv_state = jnp.zeros((B, H, C, C), jnp.float32)

    out_x, out_wkv, out_vf = qwerky7_layer_block(
        params, x, last_wkv_state, v_first, n_heads=H, head_size=C)
    jax.block_until_ready((out_x, out_wkv, out_vf))

    assert out_x.shape == (B, T, D) and out_x.dtype == jnp.bfloat16
    assert out_wkv.shape == (B, H, C, C)
    assert out_vf.shape == (B, T, D)
    assert bool(jnp.all(jnp.isfinite(out_x.astype(jnp.float32))))
    assert bool(jnp.all(jnp.isfinite(out_wkv)))

    # --- verify the chunked WKV-7 kernel against a sequential reference -----
    f32 = jnp.float32
    ks = jax.random.split(k_chk, 8)
    kk = jax.random.normal(ks[0], (B, T, H, C), f32)
    kk = kk / jnp.linalg.norm(kk, axis=-1, keepdims=True)
    iclr = jax.random.uniform(ks[1], (B, T, H, C), f32, 0.0, 1.0)
    a_c = (-kk).astype(jnp.bfloat16)
    b_c = (kk * iclr).astype(jnp.bfloat16)
    r_c = (0.3 * jax.random.normal(ks[2], (B, T, H, C), f32)).astype(jnp.bfloat16)
    k_c = (0.3 * jax.random.normal(ks[3], (B, T, H, C), f32)).astype(jnp.bfloat16)
    v_c = (0.3 * jax.random.normal(ks[4], (B, T, H, C), f32)).astype(jnp.bfloat16)
    lw_c = -jax.random.uniform(ks[5], (B, T, H, C), f32, 0.05, 0.5)
    s0_c = 0.3 * jax.random.normal(ks[6], (B, H, C, C), f32)   # key x value

    flat = lambda t: t.reshape(B, T, D)
    o_pl, s_pl = wkv7_chunked(flat(r_c), flat(lw_c), flat(k_c), flat(v_c),
                              flat(a_c), flat(b_c),
                              jnp.swapaxes(s0_c, 2, 3), H, C)
    o_ref, s_ref = wkv7_sequential_ref(
        r_c.astype(f32), lw_c, k_c.astype(f32), v_c.astype(f32),
        a_c.astype(f32), b_c.astype(f32), s0_c)
    o_ref = o_ref.reshape(B, T, D)
    s_ref_t = jnp.swapaxes(s_ref, 2, 3)   # kernel carries value x key
    jax.block_until_ready((o_pl, s_pl, o_ref, s_ref_t))

    err_o = float(jnp.max(jnp.abs(o_pl.astype(f32) - o_ref)))
    err_s = float(jnp.max(jnp.abs(s_pl - s_ref_t)))
    tol_o = 3e-2 * (float(jnp.max(jnp.abs(o_ref))) + 1e-3) + 1e-2
    tol_s = 3e-2 * (float(jnp.max(jnp.abs(s_ref_t))) + 1e-3) + 1e-2
    assert err_o <= tol_o, ("wkv output mismatch", err_o, tol_o)
    assert err_s <= tol_s, ("wkv state mismatch", err_s, tol_s)

    print("KERNEL_OK")
</pallas_src>

<mosaic_0001>
module attributes {stable_mosaic.version = 11 : i64} {
  func.func @_rmsnorm_kernel(%arg0: i32, %arg1: memref<256x256xbf16, #tpu.memory_space<vmem>>, %arg2: memref<1x256xbf16, #tpu.memory_space<vmem>>, %arg3: memref<256x256xbf16, #tpu.memory_space<vmem>>) attributes {dimension_semantics = [#tpu.dimension_semantics<parallel>], iteration_bounds = array<i64: 1>, scalar_prefetch = 0 : i64, scratch_operands = 0 : i64, tpu.core_type = #tpu.core_type<tc>, window_params = [{transform_indices = @transform_0, window_bounds = array<i64: 256, 256>}, {pipeline_mode = #tpu.pipeline_mode<synchronous>, transform_indices = @transform_1, window_bounds = array<i64: 1, 256>}, {transform_indices = @transform_2, window_bounds = array<i64: 256, 256>}]} {
    %c0 = arith.constant 0 : index
    %c0_0 = arith.constant 0 : index
    %0 = vector.load %arg1[%c0, %c0_0] : memref<256x256xbf16, #tpu.memory_space<vmem>>, vector<256x256xbf16>
    %1 = arith.extf %0 : vector<256x256xbf16> to vector<256x256xf32>
    %2 = arith.mulf %1, %1 : vector<256x256xf32>
    %cst = arith.constant dense<0.000000e+00> : vector<256xf32>
    %3 = vector.multi_reduction <add>, %2, %cst [1] : vector<256x256xf32> to vector<256xf32>
    %4 = vector.shape_cast %3 : vector<256xf32> to vector<256x1xf32>
    %cst_1 = arith.constant 2.560000e+02 : f32
    %5 = vector.broadcast %cst_1 : f32 to vector<256x1xf32>
    %6 = arith.divf %4, %5 : vector<256x1xf32>
    %cst_2 = arith.constant 9.99999997E-7 : f32
    %7 = vector.broadcast %cst_2 : f32 to vector<256x1xf32>
    %8 = arith.addf %6, %7 : vector<256x1xf32>
    %9 = math.rsqrt %8 : vector<256x1xf32>
    %10 = vector.broadcast %9 : vector<256x1xf32> to vector<256x256xf32>
    %11 = arith.mulf %1, %10 : vector<256x256xf32>
    %c0_3 = arith.constant 0 : index
    %c0_4 = arith.constant 0 : index
    %12 = vector.load %arg2[%c0_3, %c0_4] : memref<1x256xbf16, #tpu.memory_space<vmem>>, vector<1x256xbf16>
    %13 = arith.extf %12 : vector<1x256xbf16> to vector<1x256xf32>
    %14 = vector.broadcast %13 : vector<1x256xf32> to vector<256x256xf32>
    %15 = arith.mulf %11, %14 : vector<256x256xf32>
    %16 = arith.truncf %15 : vector<256x256xf32> to vector<256x256xbf16>
    %c0_5 = arith.constant 0 : index
    %c0_6 = arith.constant 0 : index
    %17 = vector.load %arg3[%c0_5, %c0_6] : memref<256x256xbf16, #tpu.memory_space<vmem>>, vector<256x256xbf16>
    tpu.vector_store %arg3[%c0_5, %c0_6], %16 {strides = array<i32>} : memref<256x256xbf16, #tpu.memory_space<vmem>>, vector<256x256xbf16>,
    return
  }
  func.func @transform_0(%arg0: i32) -> (i32, i32) {
    %c0_i32 = arith.constant 0 : i32
    %c0_i32_0 = arith.constant 0 : i32
    return %arg0, %c0_i32 : i32, i32
  }
  func.func @transform_1(%arg0: i32) -> (i32, i32) {
    %c0_i32 = arith.constant 0 : i32
    %c0_i32_0 = arith.constant 0 : i32
    %c0_i32_1 = arith.constant 0 : i32
    return %c0_i32, %c0_i32_0 : i32, i32
  }
  func.func @transform_2(%arg0: i32) -> (i32, i32) {
    %c0_i32 = arith.constant 0 : i32
    %c0_i32_0 = arith.constant 0 : i32
    return %arg0, %c0_i32 : i32, i32
  }
}

</mosaic_0001>

<llo_original>
// kernel: tpu_custom_call.1
$region0: #{tpu_custom_call.1}
  #allocation0 [shape = 'u32[]', space=smem, size = 0x4, offset = 0x4, fixed_abs, tag = 'smem constant byte address 0x4 - core index']
  #allocation1 [shape = 'u32[72,128]{1,0:T(1,128)}', space=vmem, size = 0x9000, scoped, tag = 'internal scratch']
  %s0 = inlined_call_operand.hbm [shape: bf16[256,256], index: 0, kind: input, shape index: {}]
  %s1 = inlined_call_operand.hbm [shape: bf16[1,256], index: 1, kind: input, shape index: {}]
  %s2 = inlined_call_operand.hbm [shape: bf16[256,256], index: 2, kind: output, shape index: {}]
  %s3 = sld [smem:[#allocation0]]
  $region26: #{tpu_custom_call.1} parent=0
    _
  %s5 = ssub.s32 1, %s3
  %s6 = scalar_select 0, %s5, %s3
  $region1: #{tpu_custom_call.1} parent=0
    #allocation2 [shape = 'u8[131072]{0}', space=vmem, size = 0x20000, scoped, tag = 'input window, operand 0, single buffered']
    #allocation3 [shape = 's32[1]{0}', space=sflag, size = 0x4, scoped, tag = 'scoped memory for tpu_custom_call.1']
    #allocation4 [shape = 's32[1]{0}', space=sflag, size = 0x4, scoped, tag = 'scoped memory for tpu_custom_call.1']
    #allocation5 [shape = 'u8[1024]{0}', space=vmem, size = 0x400, scoped, tag = 'input window, operand 1, single buffered']
    #allocation6 [shape = 's32[1]{0}', space=sflag, size = 0x4, scoped, tag = 'scoped memory for tpu_custom_call.1']
    #allocation7 [shape = 'u8[131072]{0}', space=vmem, size = 0x20000, scoped, tag = 'output window, operand 0, single buffered']
    %7 = vsyncpa [#allocation3], 0
    %8 = vsyncpa [#allocation6], 0
    %9 = vsyncpa [#allocation4], 0
    // Predicated region
    $region2: #{tpu_custom_call.1} parent=1 // pred_check
      _
    $region3: #{tpu_custom_call.1} parent=1 // pred_check_branch
      %11 = sbr.rel (0) target = $region5
    $region4: #{tpu_custom_call.1} parent=1 // pred_region
      %13 = vsyncadd [#allocation3], 0
      %s14 = sshll.u32 %s0, 4
      %s15 = int_to_ptr.hbm [resolvable:$true] %s14
      %s16 = sshll.u32 [#allocation2], 4
      %s17 = int_to_ptr.vmem [resolvable:$true] %s16
      %22 = dma.hbm_to_vmem [thread:$0]  %s15, 4096, %s17, [#allocation3], 128, 128, 8
    $region5: #{tpu_custom_call.1} parent=1 // pred_fallthru
      _
    // Predicated region
    $region6: #{tpu_custom_call.1} parent=1 // pred_check
      _
    $region7: #{tpu_custom_call.1} parent=1 // pred_check_branch
      %24 = sbr.rel (0) target = $region9
    $region8: #{tpu_custom_call.1} parent=1 // pred_region
      %26 = vsyncadd [#allocation6], 0
      %s28 = sshll.u32 %s1, 4
      %s29 = int_to_ptr.hbm [resolvable:$true] %s28
      %s30 = sshll.u32 [#allocation5], 4
      %s31 = int_to_ptr.vmem [resolvable:$true] %s30
      %33 = dma.hbm_to_vmem [thread:$0]  %s29, 32, %s31, [#allocation6]
    $region9: #{tpu_custom_call.1} parent=1 // pred_fallthru
      _
    // Predicated region
    $region10: #{tpu_custom_call.1} parent=1 // pred_check
      _
    $region11: #{tpu_custom_call.1} parent=1 // pred_check_branch
      %35 = sbr.rel (0) target = $region13
    $region12: #{tpu_custom_call.1} parent=1 // pred_region
      %37 = dma.done [#allocation3], 4096
    $region13: #{tpu_custom_call.1} parent=1 // pred_fallthru
      _
    // Predicated region
    $region14: #{tpu_custom_call.1} parent=1 // pred_check
      _
    $region15: #{tpu_custom_call.1} parent=1 // pred_check_branch
      %39 = sbr.rel (0) target = $region17
    $region16: #{tpu_custom_call.1} parent=1 // pred_region
      %41 = dma.done [#allocation6], 32
    $region17: #{tpu_custom_call.1} parent=1 // pred_fallthru
      _
    %v42 = vld [vmem:[#allocation2] sm:$0xff]
    %v43 = vld [vmem:[#allocation2 + $0x8] sm:$0xff]
    %v44 = vld [vmem:[#allocation2 + $0x10] sm:$0xff]
    %v45 = vld [vmem:[#allocation2 + $0x18] sm:$0xff]
    %v46 = vld [vmem:[#allocation2 + $0x20] sm:$0xff]
    %v47 = vld [vmem:[#allocation2 + $0x28] sm:$0xff]
    %v48 = vld [vmem:[#allocation2 + $0x30] sm:$0xff]
    %v49 = vld [vmem:[#allocation2 + $0x38] sm:$0xff]
    %v50 = vld [vmem:[#allocation2 + $0x40] sm:$0xff]
    %v51 = vld [vmem:[#allocation2 + $0x48] sm:$0xff]
    %v52 = vld [vmem:[#allocation2 + $0x50] sm:$0xff]
    %v53 = vld [vmem:[#allocation2 + $0x58] sm:$0xff]
    %v54 = vld [vmem:[#allocation2 + $0x60] sm:$0xff]
    %v55 = vld [vmem:[#allocation2 + $0x68] sm:$0xff]
    %v56 = vld [vmem:[#allocation2 + $0x70] sm:$0xff]
    %v57 = vld [vmem:[#allocation2 + $0x78] sm:$0xff]
    %v58 = vld [vmem:[#allocation2 + $0x80] sm:$0xff]
    %v59 = vld [vmem:[#allocation2 + $0x88] sm:$0xff]
    %v60 = vld [vmem:[#allocation2 + $0x90] sm:$0xff]
    %v61 = vld [vmem:[#allocation2 + $0x98] sm:$0xff]
    %v62 = vld [vmem:[#allocation2 + $0xa0] sm:$0xff]
    %v63 = vld [vmem:[#allocation2 + $0xa8] sm:$0xff]
    %v64 = vld [vmem:[#allocation2 + $0xb0] sm:$0xff]
    %v65 = vld [vmem:[#allocation2 + $0xb8] sm:$0xff]
    %v66 = vld [vmem:[#allocation2 + $0xc0] sm:$0xff]
    %v67 = vld [vmem:[#allocation2 + $0xc8] sm:$0xff]
    %v68 = vld [vmem:[#allocation2 + $0xd0] sm:$0xff]
    %v69 = vld [vmem:[#allocation2 + $0xd8] sm:$0xff]
    %v70 = vld [vmem:[#allocation2 + $0xe0] sm:$0xff]
    %v71 = vld [vmem:[#allocation2 + $0xe8] sm:$0xff]
    %v72 = vld [vmem:[#allocation2 + $0xf0] sm:$0xff]
    %v73 = vld [vmem:[#allocation2 + $0xf8] sm:$0xff]
    %v74 = vunpack.c.l.bf16 %v42
    %v75 = vunpack.c.h.bf16 %v42
    %v76 = vunpack.c.l.bf16 %v43
    %v77 = vunpack.c.h.bf16 %v43
    %v78 = vunpack.c.l.bf16 %v44
    %v79 = vunpack.c.h.bf16 %v44
    %v80 = vunpack.c.l.bf16 %v45
    %v81 = vunpack.c.h.bf16 %v45
    %v82 = vunpack.c.l.bf16 %v46
    %v83 = vunpack.c.h.bf16 %v46
    %v84 = vunpack.c.l.bf16 %v47
    %v85 = vunpack.c.h.bf16 %v47
    %v86 = vunpack.c.l.bf16 %v48
    %v87 = vunpack.c.h.bf16 %v48
    %v88 = vunpack.c.l.bf16 %v49
    %v89 = vunpack.c.h.bf16 %v49
    %v90 = vunpack.c.l.bf16 %v50
    %v91 = vunpack.c.h.bf16 %v50
    %v92 = vunpack.c.l.bf16 %v51
    %v93 = vunpack.c.h.bf16 %v51
    %v94 = vunpack.c.l.bf16 %v52
    %v95 = vunpack.c.h.bf16 %v52
    %v96 = vunpack.c.l.bf16 %v53
    %v97 = vunpack.c.h.bf16 %v53
    %v98 = vunpack.c.l.bf16 %v54
    %v99 = vunpack.c.h.bf16 %v54
    %v100 = vunpack.c.l.bf16 %v55
    %v101 = vunpack.c.h.bf16 %v55
    %v102 = vunpack.c.l.bf16 %v56
    %v103 = vunpack.c.h.bf16 %v56
    %v104 = vunpack.c.l.bf16 %v57
    %v105 = vunpack.c.h.bf16 %v57
    %v106 = vunpack.c.l.bf16 %v58
    %v107 = vunpack.c.h.bf16 %v58
    %v108 = vunpack.c.l.bf16 %v59
    %v109 = vunpack.c.h.bf16 %v59
    %v110 = vunpack.c.l.bf16 %v60
    %v111 = vunpack.c.h.bf16 %v60
    %v112 = vunpack.c.l.bf16 %v61
    %v113 = vunpack.c.h.bf16 %v61
    %v114 = vunpack.c.l.bf16 %v62
    %v115 = vunpack.c.h.bf16 %v62
    %v116 = vunpack.c.l.bf16 %v63
    %v117 = vunpack.c.h.bf16 %v63
    %v118 = vunpack.c.l.bf16 %v64
    %v119 = vunpack.c.h.bf16 %v64
    %v120 = vunpack.c.l.bf16 %v65
    %v121 = vunpack.c.h.bf16 %v65
    %v122 = vunpack.c.l.bf16 %v66
    %v123 = vunpack.c.h.bf16 %v66
    %v124 = vunpack.c.l.bf16 %v67
    %v125 = vunpack.c.h.bf16 %v67
    %v126 = vunpack.c.l.bf16 %v68
    %v127 = vunpack.c.h.bf16 %v68
    %v128 = vunpack.c.l.bf16 %v69
    %v129 = vunpack.c.h.bf16 %v69
    %v130 = vunpack.c.l.bf16 %v70
    %v131 = vunpack.c.h.bf16 %v70
    %v132 = vunpack.c.l.bf16 %v71
    %v133 = vunpack.c.h.bf16 %v71
    %v134 = vunpack.c.l.bf16 %v72
    %v135 = vunpack.c.h.bf16 %v72
    %v136 = vunpack.c.l.bf16 %v73
    %v137 = vunpack.c.h.bf16 %v73
    %v138 = vmul.f32 %v74, %v74
    %v139 = vmul.f32 %v75, %v75
    %v140 = vmul.f32 %v76, %v76
    %v141 = vmul.f32 %v77, %v77
    %v142 = vmul.f32 %v78, %v78
    %v143 = vmul.f32 %v79, %v79
    %v144 = vmul.f32 %v80, %v80
    %v145 = vmul.f32 %v81, %v81
    %v146 = vmul.f32 %v82, %v82
    %v147 = vmul.f32 %v83, %v83
    %v148 = vmul.f32 %v84, %v84
    %v149 = vmul.f32 %v85, %v85
    %v150 = vmul.f32 %v86, %v86
    %v151 = vmul.f32 %v87, %v87
    %v152 = vmul.f32 %v88, %v88
    %v153 = vmul.f32 %v89, %v89
    %v154 = vmul.f32 %v90, %v90
    %v155 = vmul.f32 %v91, %v91
    %v156 = vmul.f32 %v92, %v92
    %v157 = vmul.f32 %v93, %v93
    %v158 = vmul.f32 %v94, %v94
    %v159 = vmul.f32 %v95, %v95
    %v160 = vmul.f32 %v96, %v96
    %v161 = vmul.f32 %v97, %v97
    %v162 = vmul.f32 %v98, %v98
    %v163 = vmul.f32 %v99, %v99
    %v164 = vmul.f32 %v100, %v100
    %v165 = vmul.f32 %v101, %v101
    %v166 = vmul.f32 %v102, %v102
    %v167 = vmul.f32 %v103, %v103
    %v168 = vmul.f32 %v104, %v104
    %v169 = vmul.f32 %v105, %v105
    %v170 = vmul.f32 %v106, %v106
    %v171 = vmul.f32 %v107, %v107
    %v172 = vmul.f32 %v108, %v108
    %v173 = vmul.f32 %v109, %v109
    %v174 = vmul.f32 %v110, %v110
    %v175 = vmul.f32 %v111, %v111
    %v176 = vmul.f32 %v112, %v112
    %v177 = vmul.f32 %v113, %v113
    %v178 = vmul.f32 %v114, %v114
    %v179 = vmul.f32 %v115, %v115
    %v180 = vmul.f32 %v116, %v116
    %v181 = vmul.f32 %v117, %v117
    %v182 = vmul.f32 %v118, %v118
    %v183 = vmul.f32 %v119, %v119
    %v184 = vmul.f32 %v120, %v120
    %v185 = vmul.f32 %v121, %v121
    %v186 = vmul.f32 %v122, %v122
    %v187 = vmul.f32 %v123, %v123
    %v188 = vmul.f32 %v124, %v124
    %v189 = vmul.f32 %v125, %v125
    %v190 = vmul.f32 %v126, %v126
    %v191 = vmul.f32 %v127, %v127
    %v192 = vmul.f32 %v128, %v128
    %v193 = vmul.f32 %v129, %v129
    %v194 = vmul.f32 %v130, %v130
    %v195 = vmul.f32 %v131, %v131
    %v196 = vmul.f32 %v132, %v132
    %v197 = vmul.f32 %v133, %v133
    %v198 = vmul.f32 %v134, %v134
    %v199 = vmul.f32 %v135, %v135
    %v200 = vmul.f32 %v136, %v136
    %v201 = vmul.f32 %v137, %v137
    %v202 = vadd.f32 %v138, %v139
    %203 = vadd.xlane.f32.xlu0 %v202
    %v204 = vpop.xlane.xlu0 %203
    %v205 = vadd.f32 %v140, %v141
    %206 = vadd.xlane.f32.xlu0 %v205
    %v207 = vpop.xlane.xlu0 %206
    %v208 = vadd.f32 %v142, %v143
    %209 = vadd.xlane.f32.xlu0 %v208
    %v210 = vpop.xlane.xlu0 %209
    %v211 = vadd.f32 %v144, %v145
    %212 = vadd.xlane.f32.xlu0 %v211
    %v213 = vpop.xlane.xlu0 %212
    %v214 = vadd.f32 %v146, %v147
    %215 = vadd.xlane.f32.xlu0 %v214
    %v216 = vpop.xlane.xlu0 %215
    %v217 = vadd.f32 %v148, %v149
    %218 = vadd.xlane.f32.xlu0 %v217
    %v219 = vpop.xlane.xlu0 %218
    %v220 = vadd.f32 %v150, %v151
    %221 = vadd.xlane.f32.xlu0 %v220
    %v222 = vpop.xlane.xlu0 %221
    %v223 = vadd.f32 %v152, %v153
    %224 = vadd.xlane.f32.xlu0 %v223
    %v225 = vpop.xlane.xlu0 %224
    %v226 = vadd.f32 %v154, %v155
    %227 = vadd.xlane.f32.xlu0 %v226
    %v228 = vpop.xlane.xlu0 %227
    %v229 = vadd.f32 %v156, %v157
    %230 = vadd.xlane.f32.xlu0 %v229
    %v231 = vpop.xlane.xlu0 %230
    %v232 = vadd.f32 %v158, %v159
    %233 = vadd.xlane.f32.xlu0 %v232
    %v234 = vpop.xlane.xlu0 %233
    %v235 = vadd.f32 %v160, %v161
    %236 = vadd.xlane.f32.xlu0 %v235
    %v237 = vpop.xlane.xlu0 %236
    %v238 = vadd.f32 %v162, %v163
    %239 = vadd.xlane.f32.xlu0 %v238
    %v240 = vpop.xlane.xlu0 %239
    %v241 = vadd.f32 %v164, %v165
    %242 = vadd.xlane.f32.xlu0 %v241
    %v243 = vpop.xlane.xlu0 %242
    %v244 = vadd.f32 %v166, %v167
    %245 = vadd.xlane.f32.xlu0 %v244
    %v246 = vpop.xlane.xlu0 %245
    %v247 = vadd.f32 %v168, %v169
    %248 = vadd.xlane.f32.xlu0 %v247
    %v249 = vpop.xlane.xlu0 %248
    %v250 = vadd.f32 %v170, %v171
    %251 = vadd.xlane.f32.xlu0 %v250
    %v252 = vpop.xlane.xlu0 %251
    %v253 = vadd.f32 %v172, %v173
    %254 = vadd.xlane.f32.xlu0 %v253
    %v255 = vpop.xlane.xlu0 %254
    %v256 = vadd.f32 %v174, %v175
    %257 = vadd.xlane.f32.xlu0 %v256
    %v258 = vpop.xlane.xlu0 %257
    %v259 = vadd.f32 %v176, %v177
    %260 = vadd.xlane.f32.xlu0 %v259
    %v261 = vpop.xlane.xlu0 %260
    %v262 = vadd.f32 %v178, %v179
    %263 = vadd.xlane.f32.xlu0 %v262
    %v264 = vpop.xlane.xlu0 %263
    %v265 = vadd.f32 %v180, %v181
    %266 = vadd.xlane.f32.xlu0 %v265
    %v267 = vpop.xlane.xlu0 %266
    %v268 = vadd.f32 %v182, %v183
    %269 = vadd.xlane.f32.xlu0 %v268
    %v270 = vpop.xlane.xlu0 %269
    %v271 = vadd.f32 %v184, %v185
    %272 = vadd.xlane.f32.xlu0 %v271
    %v273 = vpop.xlane.xlu0 %272
    %v274 = vadd.f32 %v186, %v187
    %275 = vadd.xlane.f32.xlu0 %v274
    %v276 = vpop.xlane.xlu0 %275
    %v277 = vadd.f32 %v188, %v189
    %278 = vadd.xlane.f32.xlu0 %v277
    %v279 = vpop.xlane.xlu0 %278
    %v280 = vadd.f32 %v190, %v191
    %281 = vadd.xlane.f32.xlu0 %v280
    %v282 = vpop.xlane.xlu0 %281
    %v283 = vadd.f32 %v192, %v193
    %284 = vadd.xlane.f32.xlu0 %v283
    %v285 = vpop.xlane.xlu0 %284
    %v286 = vadd.f32 %v194, %v195
    %287 = vadd.xlane.f32.xlu0 %v286
    %v288 = vpop.xlane.xlu0 %287
    %v289 = vadd.f32 %v196, %v197
    %290 = vadd.xlane.f32.xlu0 %v289
    %v291 = vpop.xlane.xlu0 %290
    %v292 = vadd.f32 %v198, %v199
    %293 = vadd.xlane.f32.xlu0 %v292
    %v294 = vpop.xlane.xlu0 %293
    %v295 = vadd.f32 %v200, %v201
    %296 = vadd.xlane.f32.xlu0 %v295
    %v297 = vpop.xlane.xlu0 %296
    %v298 = vrcp.pop 256.0
    %v299 = vmul.f32 256.0, %v298
    %v300 = vsub.f32 1.0, %v299
    %v301 = vmul.f32 %v298, %v300
    %v302 = vadd.f32 %v298, %v301
    %vm303 = vweird.f32 %v298
    %v304 = vsel %vm303, %v298, %v302
    %v305 = vmul.f32 %v204, %v304
    %v306 = vmul.f32 %v207, %v304
    %v307 = vmul.f32 %v210, %v304
    %v308 = vmul.f32 %v213, %v304
    %v309 = vmul.f32 %v216, %v304
    %v310 = vmul.f32 %v219, %v304
    %v311 = vmul.f32 %v222, %v304
    %v312 = vmul.f32 %v225, %v304
    %v313 = vmul.f32 %v228, %v304
    %v314 = vmul.f32 %v231, %v304
    %v315 = vmul.f32 %v234, %v304
    %v316 = vmul.f32 %v237, %v304
    %v317 = vmul.f32 %v240, %v304
    %v318 = vmul.f32 %v243, %v304
    %v319 = vmul.f32 %v246, %v304
    %v320 = vmul.f32 %v249, %v304
    %v321 = vmul.f32 %v252, %v304
    %v322 = vmul.f32 %v255, %v304
    %v323 = vmul.f32 %v258, %v304
    %v324 = vmul.f32 %v261, %v304
    %v325 = vmul.f32 %v264, %v304
    %v326 = vmul.f32 %v267, %v304
    %v327 = vmul.f32 %v270, %v304
    %v328 = vmul.f32 %v273, %v304
    %v329 = vmul.f32 %v276, %v304
    %v330 = vmul.f32 %v279, %v304
    %v331 = vmul.f32 %v282, %v304
    %v332 = vmul.f32 %v285, %v304
    %v333 = vmul.f32 %v288, %v304
    %v334 = vmul.f32 %v291, %v304
    %v335 = vmul.f32 %v294, %v304
    %v336 = vmul.f32 %v297, %v304
    %v337 = vadd.f32 %v305, 1e-06
    %v338 = vadd.f32 %v306, 1e-06
    %v339 = vadd.f32 %v307, 1e-06
    %v340 = vadd.f32 %v308, 1e-06
    %v341 = vadd.f32 %v309, 1e-06
    %v342 = vadd.f32 %v310, 1e-06
    %v343 = vadd.f32 %v311, 1e-06
    %v344 = vadd.f32 %v312, 1e-06
    %v345 = vadd.f32 %v313, 1e-06
    %v346 = vadd.f32 %v314, 1e-06
    %v347 = vadd.f32 %v315, 1e-06
    %v348 = vadd.f32 %v316, 1e-06
    %v349 = vadd.f32 %v317, 1e-06
    %v350 = vadd.f32 %v318, 1e-06
    %v351 = vadd.f32 %v319, 1e-06
    %v352 = vadd.f32 %v320, 1e-06
    %v353 = vadd.f32 %v321, 1e-06
    %v354 = vadd.f32 %v322, 1e-06
    %v355 = vadd.f32 %v323, 1e-06
    %v356 = vadd.f32 %v324, 1e-06
    %v357 = vadd.f32 %v325, 1e-06
    %v358 = vadd.f32 %v326, 1e-06
    %v359 = vadd.f32 %v327, 1e-06
    %v360 = vadd.f32 %v328, 1e-06
    %v361 = vadd.f32 %v329, 1e-06
    %v362 = vadd.f32 %v330, 1e-06
    %v363 = vadd.f32 %v331, 1e-06
    %v364 = vadd.f32 %v332, 1e-06
    %v365 = vadd.f32 %v333, 1e-06
    %v366 = vadd.f32 %v334, 1e-06
    %v367 = vadd.f32 %v335, 1e-06
    %v368 = vadd.f32 %v336, 1e-06
    %v369 = vrsqrt.pop %v337
    %v370 = vmul.f32 %v369, %v337
    %v371 = vmul.f32 %v370, %v369
    %v372 = vmul.f32 0.5, %v371
    %v373 = vsub.f32 1.5, %v372
    %v374 = vmul.f32 %v369, %v373
    %vm375 = vweird.f32 %v337
    %vm376 = vweird.f32 %v369
    %vm377 = vmor %vm375, %vm376
    %v378 = vsel %vm377, %v369, %v374
    %v379 = vrsqrt.pop %v338
    %v380 = vmul.f32 %v379, %v338
    %v381 = vmul.f32 %v380, %v379
    %v382 = vmul.f32 0.5, %v381
    %v383 = vsub.f32 1.5, %v382
    %v384 = vmul.f32 %v379, %v383
    %vm385 = vweird.f32 %v338
    %vm386 = vweird.f32 %v379
    %vm387 = vmor %vm385, %vm386
    %v388 = vsel %vm387, %v379, %v384
    %v389 = vrsqrt.pop %v339
    %v390 = vmul.f32 %v389, %v339
    %v391 = vmul.f32 %v390, %v389
    %v392 = vmul.f32 0.5, %v391
    %v393 = vsub.f32 1.5, %v392
    %v394 = vmul.f32 %v389, %v393
    %vm395 = vweird.f32 %v339
    %vm396 = vweird.f32 %v389
    %vm397 = vmor %vm395, %vm396
    %v398 = vsel %vm397, %v389, %v394
    %v399 = vrsqrt.pop %v340
    %v400 = vmul.f32 %v399, %v340
    %v401 = vmul.f32 %v400, %v399
    %v402 = vmul.f32 0.5, %v401
    %v403 = vsub.f32 1.5, %v402
    %v404 = vmul.f32 %v399, %v403
    %vm405 = vweird.f32 %v340
    %vm406 = vweird.f32 %v399
    %vm407 = vmor %vm405, %vm406
    %v408 = vsel %vm407, %v399, %v404
    %v409 = vrsqrt.pop %v341
    %v410 = vmul.f32 %v409, %v341
    %v411 = vmul.f32 %v410, %v409
    %v412 = vmul.f32 0.5, %v411
    %v413 = vsub.f32 1.5, %v412
    %v414 = vmul.f32 %v409, %v413
    %vm415 = vweird.f32 %v341
    %vm416 = vweird.f32 %v409
    %vm417 = vmor %vm415, %vm416
    %v418 = vsel %vm417, %v409, %v414
    %v419 = vrsqrt.pop %v342
    %v420 = vmul.f32 %v419, %v342
    %v421 = vmul.f32 %v420, %v419
    %v422 = vmul.f32 0.5, %v421
    %v423 = vsub.f32 1.5, %v422
    %v424 = vmul.f32 %v419, %v423
    %vm425 = vweird.f32 %v342
    %vm426 = vweird.f32 %v419
    %vm427 = vmor %vm425, %vm426
    %v428 = vsel %vm427, %v419, %v424
    %v429 = vrsqrt.pop %v343
    %v430 = vmul.f32 %v429, %v343
    %v431 = vmul.f32 %v430, %v429
    %v432 = vmul.f32 0.5, %v431
    %v433 = vsub.f32 1.5, %v432
    %v434 = vmul.f32 %v429, %v433
    %vm435 = vweird.f32 %v343
    %vm436 = vweird.f32 %v429
    %vm437 = vmor %vm435, %vm436
    %v438 = vsel %vm437, %v429, %v434
    %v439 = vrsqrt.pop %v344
    %v440 = vmul.f32 %v439, %v344
    %v441 = vmul.f32 %v440, %v439
    %v442 = vmul.f32 0.5, %v441
    %v443 = vsub.f32 1.5, %v442
    %v444 = vmul.f32 %v439, %v443
    %vm445 = vweird.f32 %v344
    %vm446 = vweird.f32 %v439
    %vm447 = vmor %vm445, %vm446
    %v448 = vsel %vm447, %v439, %v444
    %v449 = vrsqrt.pop %v345
    %v450 = vmul.f32 %v449, %v345
    %v451 = vmul.f32 %v450, %v449
    %v452 = vmul.f32 0.5, %v451
    %v453 = vsub.f32 1.5, %v452
    %v454 = vmul.f32 %v449, %v453
    %vm455 = vweird.f32 %v345
    %vm456 = vweird.f32 %v449
    %vm457 = vmor %vm455, %vm456
    %v458 = vsel %vm457, %v449, %v454
    %v459 = vrsqrt.pop %v346
    %v460 = vmul.f32 %v459, %v346
    %v461 = vmul.f32 %v460, %v459
    %v462 = vmul.f32 0.5, %v461
    %v463 = vsub.f32 1.5, %v462
    %v464 = vmul.f32 %v459, %v463
    %vm465 = vweird.f32 %v346
    %vm466 = vweird.f32 %v459
    %vm467 = vmor %vm465, %vm466
    %v468 = vsel %vm467, %v459, %v464
    %v469 = vrsqrt.pop %v347
    %v470 = vmul.f32 %v469, %v347
    %v471 = vmul.f32 %v470, %v469
    %v472 = vmul.f32 0.5, %v471
    %v473 = vsub.f32 1.5, %v472
    %v474 = vmul.f32 %v469, %v473
    %vm475 = vweird.f32 %v347
    %vm476 = vweird.f32 %v469
    %vm477 = vmor %vm475, %vm476
    %v478 = vsel %vm477, %v469, %v474
    %v479 = vrsqrt.pop %v348
    %v480 = vmul.f32 %v479, %v348
    %v481 = vmul.f32 %v480, %v479
    %v482 = vmul.f32 0.5, %v481
    %v483 = vsub.f32 1.5, %v482
    %v484 = vmul.f32 %v479, %v483
    %vm485 = vweird.f32 %v348
    %vm486 = vweird.f32 %v479
    %vm487 = vmor %vm485, %vm486
    %v488 = vsel %vm487, %v479, %v484
    %v489 = vrsqrt.pop %v349
    %v490 = vmul.f32 %v489, %v349
    %v491 = vmul.f32 %v490, %v489
    %v492 = vmul.f32 0.5, %v491
    %v493 = vsub.f32 1.5, %v492
    %v494 = vmul.f32 %v489, %v493
    %vm495 = vweird.f32 %v349
    %vm496 = vweird.f32 %v489
    %vm497 = vmor %vm495, %vm496
    %v498 = vsel %vm497, %v489, %v494
    %v499 = vrsqrt.pop %v350
    %v500 = vmul.f32 %v499, %v350
    %v501 = vmul.f32 %v500, %v499
    %v502 = vmul.f32 0.5, %v501
    %v503 = vsub.f32 1.5, %v502
    %v504 = vmul.f32 %v499, %v503
    %vm505 = vweird.f32 %v350
    %vm506 = vweird.f32 %v499
    %vm507 = vmor %vm505, %vm506
    %v508 = vsel %vm507, %v499, %v504
    %v509 = vrsqrt.pop %v351
    %v510 = vmul.f32 %v509, %v351
    %v511 = vmul.f32 %v510, %v509
    %v512 = vmul.f32 0.5, %v511
    %v513 = vsub.f32 1.5, %v512
    %v514 = vmul.f32 %v509, %v513
    %vm515 = vweird.f32 %v351
    %vm516 = vweird.f32 %v509
    %vm517 = vmor %vm515, %vm516
    %v518 = vsel %vm517, %v509, %v514
    %v519 = vrsqrt.pop %v352
    %v520 = vmul.f32 %v519, %v352
    %v521 = vmul.f32 %v520, %v519
    %v522 = vmul.f32 0.5, %v521
    %v523 = vsub.f32 1.5, %v522
    %v524 = vmul.f32 %v519, %v523
    %vm525 = vweird.f32 %v352
    %vm526 = vweird.f32 %v519
    %vm527 = vmor %vm525, %vm526
    %v528 = vsel %vm527, %v519, %v524
    %v529 = vrsqrt.pop %v353
    %v530 = vmul.f32 %v529, %v353
    %v531 = vmul.f32 %v530, %v529
    %v532 = vmul.f32 0.5, %v531
    %v533 = vsub.f32 1.5, %v532
    %v534 = vmul.f32 %v529, %v533
    %vm535 = vweird.f32 %v353
    %vm536 = vweird.f32 %v529
    %vm537 = vmor %vm535, %vm536
    %v538 = vsel %vm537, %v529, %v534
    %v539 = vrsqrt.pop %v354
    %v540 = vmul.f32 %v539, %v354
    %v541 = vmul.f32 %v540, %v539
    %v542 = vmul.f32 0.5, %v541
    %v543 = vsub.f32 1.5, %v542
    %v544 = vmul.f32 %v539, %v543
    %vm545 = vweird.f32 %v354
    %vm546 = vweird.f32 %v539
    %vm547 = vmor %vm545, %vm546
    %v548 = vsel %vm547, %v539, %v544
    %v549 = vrsqrt.pop %v355
    %v550 = vmul.f32 %v549, %v355
    %v551 = vmul.f32 %v550, %v549
    %v552 = vmul.f32 0.5, %v551
    %v553 = vsub.f32 1.5, %v552
    %v554 = vmul.f32 %v549, %v553
    %vm555 = vweird.f32 %v355
    %vm556 = vweird.f32 %v549
    %vm557 = vmor %vm555, %vm556
    %v558 = vsel %vm557, %v549, %v554
    %v559 = vrsqrt.pop %v356
    %v560 = vmul.f32 %v559, %v356
    %v561 = vmul.f32 %v560, %v559
    %v562 = vmul.f32 0.5, %v561
    %v563 = vsub.f32 1.5, %v562
    %v564 = vmul.f32 %v559, %v563
    %vm565 = vweird.f32 %v356
    %vm566 = vweird.f32 %v559
    %vm567 = vmor %vm565, %vm566
    %v568 = vsel %vm567, %v559, %v564
    %v569 = vrsqrt.pop %v357
    %v570 = vmul.f32 %v569, %v357
    %v571 = vmul.f32 %v570, %v569
    %v572 = vmul.f32 0.5, %v571
    %v573 = vsub.f32 1.5, %v572
    %v574 = vmul.f32 %v569, %v573
    %vm575 = vweird.f32 %v357
    %vm576 = vweird.f32 %v569
    %vm577 = vmor %vm575, %vm576
    %v578 = vsel %vm577, %v569, %v574
    %v579 = vrsqrt.pop %v358
    %v580 = vmul.f32 %v579, %v358
    %v581 = vmul.f32 %v580, %v579
    %v582 = vmul.f32 0.5, %v581
    %v583 = vsub.f32 1.5, %v582
    %v584 = vmul.f32 %v579, %v583
    %vm585 = vweird.f32 %v358
    %vm586 = vweird.f32 %v579
    %vm587 = vmor %vm585, %vm586
    %v588 = vsel %vm587, %v579, %v584
    %v589 = vrsqrt.pop %v359
    %v590 = vmul.f32 %v589, %v359
    %v591 = vmul.f32 %v590, %v589
    %v592 = vmul.f32 0.5, %v591
    %v593 = vsub.f32 1.5, %v592
    %v594 = vmul.f32 %v589, %v593
    %vm595 = vweird.f32 %v359
    %vm596 = vweird.f32 %v589
    %vm597 = vmor %vm595, %vm596
    %v598 = vsel %vm597, %v589, %v594
    %v599 = vrsqrt.pop %v360
    %v600 = vmul.f32 %v599, %v360
    %v601 = vmul.f32 %v600, %v599
    %v602 = vmul.f32 0.5, %v601
    %v603 = vsub.f32 1.5, %v602
    %v604 = vmul.f32 %v599, %v603
    %vm605 = vweird.f32 %v360
    %vm606 = vweird.f32 %v599
    %vm607 = vmor %vm605, %vm606
    %v608 = vsel %vm607, %v599, %v604
    %v609 = vrsqrt.pop %v361
    %v610 = vmul.f32 %v609, %v361
    %v611 = vmul.f32 %v610, %v609
    %v612 = vmul.f32 0.5, %v611
    %v613 = vsub.f32 1.5, %v612
    %v614 = vmul.f32 %v609, %v613
    %vm615 = vweird.f32 %v361
    %vm616 = vweird.f32 %v609
    %vm617 = vmor %vm615, %vm616
    %v618 = vsel %vm617, %v609, %v614
    %v619 = vrsqrt.pop %v362
    %v620 = vmul.f32 %v619, %v362
    %v621 = vmul.f32 %v620, %v619
    %v622 = vmul.f32 0.5, %v621
    %v623 = vsub.f32 1.5, %v622
    %v624 = vmul.f32 %v619, %v623
    %vm625 = vweird.f32 %v362
    %vm626 = vweird.f32 %v619
    %vm627 = vmor %vm625, %vm626
    %v628 = vsel %vm627, %v619, %v624
    %v629 = vrsqrt.pop %v363
    %v630 = vmul.f32 %v629, %v363
    %v631 = vmul.f32 %v630, %v629
    %v632 = vmul.f32 0.5, %v631
    %v633 = vsub.f32 1.5, %v632
    %v634 = vmul.f32 %v629, %v633
    %vm635 = vweird.f32 %v363
    %vm636 = vweird.f32 %v629
    %vm637 = vmor %vm635, %vm636
    %v638 = vsel %vm637, %v629, %v634
    %v639 = vrsqrt.pop %v364
    %v640 = vmul.f32 %v639, %v364
    %v641 = vmul.f32 %v640, %v639
    %v642 = vmul.f32 0.5, %v641
    %v643 = vsub.f32 1.5, %v642
    %v644 = vmul.f32 %v639, %v643
    %vm645 = vweird.f32 %v364
    %vm646 = vweird.f32 %v639
    %vm647 = vmor %vm645, %vm646
    %v648 = vsel %vm647, %v639, %v644
    %v649 = vrsqrt.pop %v365
    %v650 = vmul.f32 %v649, %v365
    %v651 = vmul.f32 %v650, %v649
    %v652 = vmul.f32 0.5, %v651
    %v653 = vsub.f32 1.5, %v652
    %v654 = vmul.f32 %v649, %v653
    %vm655 = vweird.f32 %v365
    %vm656 = vweird.f32 %v649
    %vm657 = vmor %vm655, %vm656
    %v658 = vsel %vm657, %v649, %v654
    %v659 = vrsqrt.pop %v366
    %v660 = vmul.f32 %v659, %v366
    %v661 = vmul.f32 %v660, %v659
    %v662 = vmul.f32 0.5, %v661
    %v663 = vsub.f32 1.5, %v662
    %v664 = vmul.f32 %v659, %v663
    %vm665 = vweird.f32 %v366
    %vm666 = vweird.f32 %v659
    %vm667 = vmor %vm665, %vm666
    %v668 = vsel %vm667, %v659, %v664
    %v669 = vrsqrt.pop %v367
    %v670 = vmul.f32 %v669, %v367
    %v671 = vmul.f32 %v670, %v669
    %v672 = vmul.f32 0.5, %v671
    %v673 = vsub.f32 1.5, %v672
    %v674 = vmul.f32 %v669, %v673
    %vm675 = vweird.f32 %v367
    %vm676 = vweird.f32 %v669
    %vm677 = vmor %vm675, %vm676
    %v678 = vsel %vm677, %v669, %v674
    %v679 = vrsqrt.pop %v368
    %v680 = vmul.f32 %v679, %v368
    %v681 = vmul.f32 %v680, %v679
    %v682 = vmul.f32 0.5, %v681
    %v683 = vsub.f32 1.5, %v682
    %v684 = vmul.f32 %v679, %v683
    %vm685 = vweird.f32 %v368
    %vm686 = vweird.f32 %v679
    %vm687 = vmor %vm685, %vm686
    %v688 = vsel %vm687, %v679, %v684
    %v689 = vmul.f32 %v74, %v378
    %v690 = vmul.f32 %v75, %v378
    %v691 = vmul.f32 %v76, %v388
    %v692 = vmul.f32 %v77, %v388
    %v693 = vmul.f32 %v78, %v398
    %v694 = vmul.f32 %v79, %v398
    %v695 = vmul.f32 %v80, %v408
    %v696 = vmul.f32 %v81, %v408
    %v697 = vmul.f32 %v82, %v418
    %v698 = vmul.f32 %v83, %v418
    %v699 = vmul.f32 %v84, %v428
    %v700 = vmul.f32 %v85, %v428
    %v701 = vmul.f32 %v86, %v438
    %v702 = vmul.f32 %v87, %v438
    %v703 = vmul.f32 %v88, %v448
    %v704 = vmul.f32 %v89, %v448
    %v705 = vmul.f32 %v90, %v458
    %v706 = vmul.f32 %v91, %v458
    %v707 = vmul.f32 %v92, %v468
    %v708 = vmul.f32 %v93, %v468
    %v709 = vmul.f32 %v94, %v478
    %v710 = vmul.f32 %v95, %v478
    %v711 = vmul.f32 %v96, %v488
    %v712 = vmul.f32 %v97, %v488
    %v713 = vmul.f32 %v98, %v498
    %v714 = vmul.f32 %v99, %v498
    %v715 = vmul.f32 %v100, %v508
    %v716 = vmul.f32 %v101, %v508
    %v717 = vmul.f32 %v102, %v518
    %v718 = vmul.f32 %v103, %v518
    %v719 = vmul.f32 %v104, %v528
    %v720 = vmul.f32 %v105, %v528
    %v721 = vmul.f32 %v106, %v538
    %v722 = vmul.f32 %v107, %v538
    %v723 = vmul.f32 %v108, %v548
    %v724 = vmul.f32 %v109, %v548
    %v725 = vmul.f32 %v110, %v558
    %v726 = vmul.f32 %v111, %v558
    %v727 = vmul.f32 %v112, %v568
    %v728 = vmul.f32 %v113, %v568
    %v729 = vmul.f32 %v114, %v578
    %v730 = vmul.f32 %v115, %v578
    %v731 = vmul.f32 %v116, %v588
    %v732 = vmul.f32 %v117, %v588
    %v733 = vmul.f32 %v118, %v598
    %v734 = vmul.f32 %v119, %v598
    %v735 = vmul.f32 %v120, %v608
    %v736 = vmul.f32 %v121, %v608
    %v737 = vmul.f32 %v122, %v618
    %v738 = vmul.f32 %v123, %v618
    %v739 = vmul.f32 %v124, %v628
    %v740 = vmul.f32 %v125, %v628
    %v741 = vmul.f32 %v126, %v638
    %v742 = vmul.f32 %v127, %v638
    %v743 = vmul.f32 %v128, %v648
    %v744 = vmul.f32 %v129, %v648
    %v745 = vmul.f32 %v130, %v658
    %v746 = vmul.f32 %v131, %v658
    %v747 = vmul.f32 %v132, %v668
    %v748 = vmul.f32 %v133, %v668
    %v749 = vmul.f32 %v134, %v678
    %v750 = vmul.f32 %v135, %v678
    %v751 = vmul.f32 %v136, %v688
    %v752 = vmul.f32 %v137, %v688
    %v753 = vld [vmem:[#allocation5] sm:$0x3]
    %v754 = vunpack.c.l.bf16 %v753
    %v756 = vperm.slane %v754, 0
    %v757 = vperm.slane %v754, 2
    %v760 = vperm.slane %v756, 0
    %v761 = vperm.slane %v757, 0
    %v762 = vmul.f32 %v689, %v760
    %v763 = vmul.f32 %v690, %v761
    %v764 = vmul.f32 %v691, %v760
    %v765 = vmul.f32 %v692, %v761
    %v766 = vmul.f32 %v693, %v760
    %v767 = vmul.f32 %v694, %v761
    %v768 = vmul.f32 %v695, %v760
    %v769 = vmul.f32 %v696, %v761
    %v770 = vmul.f32 %v697, %v760
    %v771 = vmul.f32 %v698, %v761
    %v772 = vmul.f32 %v699, %v760
    %v773 = vmul.f32 %v700, %v761
    %v774 = vmul.f32 %v701, %v760
    %v775 = vmul.f32 %v702, %v761
    %v776 = vmul.f32 %v703, %v760
    %v777 = vmul.f32 %v704, %v761
    %v778 = vmul.f32 %v705, %v760
    %v779 = vmul.f32 %v706, %v761
    %v780 = vmul.f32 %v707, %v760
    %v781 = vmul.f32 %v708, %v761
    %v782 = vmul.f32 %v709, %v760
    %v783 = vmul.f32 %v710, %v761
    %v784 = vmul.f32 %v711, %v760
    %v785 = vmul.f32 %v712, %v761
    %v786 = vmul.f32 %v713, %v760
    %v787 = vmul.f32 %v714, %v761
    %v788 = vmul.f32 %v715, %v760
    %v789 = vmul.f32 %v716, %v761
    %v790 = vmul.f32 %v717, %v760
    %v791 = vmul.f32 %v718, %v761
    %v792 = vmul.f32 %v719, %v760
    %v793 = vmul.f32 %v720, %v761
    %v794 = vmul.f32 %v721, %v760
    %v795 = vmul.f32 %v722, %v761
    %v796 = vmul.f32 %v723, %v760
    %v797 = vmul.f32 %v724, %v761
    %v798 = vmul.f32 %v725, %v760
    %v799 = vmul.f32 %v726, %v761
    %v800 = vmul.f32 %v727, %v760
    %v801 = vmul.f32 %v728, %v761
    %v802 = vmul.f32 %v729, %v760
    %v803 = vmul.f32 %v730, %v761
    %v804 = vmul.f32 %v731, %v760
    %v805 = vmul.f32 %v732, %v761
    %v806 = vmul.f32 %v733, %v760
    %v807 = vmul.f32 %v734, %v761
    %v808 = vmul.f32 %v735, %v760
    %v809 = vmul.f32 %v736, %v761
    %v810 = vmul.f32 %v737, %v760
    %v811 = vmul.f32 %v738, %v761
    %v812 = vmul.f32 %v739, %v760
    %v813 = vmul.f32 %v740, %v761
    %v814 = vmul.f32 %v741, %v760
    %v815 = vmul.f32 %v742, %v761
    %v816 = vmul.f32 %v743, %v760
    %v817 = vmul.f32 %v744, %v761
    %v818 = vmul.f32 %v745, %v760
    %v819 = vmul.f32 %v746, %v761
    %v820 = vmul.f32 %v747, %v760
    %v821 = vmul.f32 %v748, %v761
    %v822 = vmul.f32 %v749, %v760
    %v823 = vmul.f32 %v750, %v761
    %v824 = vmul.f32 %v751, %v760
    %v825 = vmul.f32 %v752, %v761
    %v826 = vpack.c.bf16 %v763, %v762
    %v827 = vpack.c.bf16 %v765, %v764
    %v828 = vpack.c.bf16 %v767, %v766
    %v829 = vpack.c.bf16 %v769, %v768
    %v830 = vpack.c.bf16 %v771, %v770
    %v831 = vpack.c.bf16 %v773, %v772
    %v832 = vpack.c.bf16 %v775, %v774
    %v833 = vpack.c.bf16 %v777, %v776
    %v834 = vpack.c.bf16 %v779, %v778
    %v835 = vpack.c.bf16 %v781, %v780
    %v836 = vpack.c.bf16 %v783, %v782
    %v837 = vpack.c.bf16 %v785, %v784
    %v838 = vpack.c.bf16 %v787, %v786
    %v839 = vpack.c.bf16 %v789, %v788
    %v840 = vpack.c.bf16 %v791, %v790
    %v841 = vpack.c.bf16 %v793, %v792
    %v842 = vpack.c.bf16 %v795, %v794
    %v843 = vpack.c.bf16 %v797, %v796
    %v844 = vpack.c.bf16 %v799, %v798
    %v845 = vpack.c.bf16 %v801, %v800
    %v846 = vpack.c.bf16 %v803, %v802
    %v847 = vpack.c.bf16 %v805, %v804
    %v848 = vpack.c.bf16 %v807, %v806
    %v849 = vpack.c.bf16 %v809, %v808
    %v850 = vpack.c.bf16 %v811, %v810
    %v851 = vpack.c.bf16 %v813, %v812
    %v852 = vpack.c.bf16 %v815, %v814
    %v853 = vpack.c.bf16 %v817, %v816
    %v854 = vpack.c.bf16 %v819, %v818
    %v855 = vpack.c.bf16 %v821, %v820
    %v856 = vpack.c.bf16 %v823, %v822
    %v857 = vpack.c.bf16 %v825, %v824
    %858 = vst [vmem:[#allocation7] sm:$0xff] %v826
    %859 = vst [vmem:[#allocation7 + $0x8] sm:$0xff] %v827
    %860 = vst [vmem:[#allocation7 + $0x10] sm:$0xff] %v828
    %861 = vst [vmem:[#allocation7 + $0x18] sm:$0xff] %v829
    %862 = vst [vmem:[#allocation7 + $0x20] sm:$0xff] %v830
    %863 = vst [vmem:[#allocation7 + $0x28] sm:$0xff] %v831
    %864 = vst [vmem:[#allocation7 + $0x30] sm:$0xff] %v832
    %865 = vst [vmem:[#allocation7 + $0x38] sm:$0xff] %v833
    %866 = vst [vmem:[#allocation7 + $0x40] sm:$0xff] %v834
    %867 = vst [vmem:[#allocation7 + $0x48] sm:$0xff] %v835
    %868 = vst [vmem:[#allocation7 + $0x50] sm:$0xff] %v836
    %869 = vst [vmem:[#allocation7 + $0x58] sm:$0xff] %v837
    %870 = vst [vmem:[#allocation7 + $0x60] sm:$0xff] %v838
    %871 = vst [vmem:[#allocation7 + $0x68] sm:$0xff] %v839
    %872 = vst [vmem:[#allocation7 + $0x70] sm:$0xff] %v840
    %873 = vst [vmem:[#allocation7 + $0x78] sm:$0xff] %v841
    %874 = vst [vmem:[#allocation7 + $0x80] sm:$0xff] %v842
    %875 = vst [vmem:[#allocation7 + $0x88] sm:$0xff] %v843
    %876 = vst [vmem:[#allocation7 + $0x90] sm:$0xff] %v844
    %877 = vst [vmem:[#allocation7 + $0x98] sm:$0xff] %v845
    %878 = vst [vmem:[#allocation7 + $0xa0] sm:$0xff] %v846
    %879 = vst [vmem:[#allocation7 + $0xa8] sm:$0xff] %v847
    %880 = vst [vmem:[#allocation7 + $0xb0] sm:$0xff] %v848
    %881 = vst [vmem:[#allocation7 + $0xb8] sm:$0xff] %v849
    %882 = vst [vmem:[#allocation7 + $0xc0] sm:$0xff] %v850
    %883 = vst [vmem:[#allocation7 + $0xc8] sm:$0xff] %v851
    %884 = vst [vmem:[#allocation7 + $0xd0] sm:$0xff] %v852
    %885 = vst [vmem:[#allocation7 + $0xd8] sm:$0xff] %v853
    %886 = vst [vmem:[#allocation7 + $0xe0] sm:$0xff] %v854
    %887 = vst [vmem:[#allocation7 + $0xe8] sm:$0xff] %v855
    %888 = vst [vmem:[#allocation7 + $0xf0] sm:$0xff] %v856
    %889 = vst [vmem:[#allocation7 + $0xf8] sm:$0xff] %v857
    // Predicated region
    $region18: #{tpu_custom_call.1} parent=1 // pred_check
      _
    $region19: #{tpu_custom_call.1} parent=1 // pred_check_branch
      %891 = sbr.rel (0) target = $region21
    $region20: #{tpu_custom_call.1} parent=1 // pred_region
      %893 = vsyncadd [#allocation4], 0
      %s894 = sshll.u32 [#allocation7], 4
      %s895 = int_to_ptr.vmem [resolvable:$true] %s894
      %s896 = sshll.u32 %s2, 4
      %s897 = int_to_ptr.hbm [resolvable:$true] %s896
      %902 = dma.vmem_to_hbm [thread:$0]  %s895, 4096, %s897, [#allocation4], 128, 128, 8
    $region21: #{tpu_custom_call.1} parent=1 // pred_fallthru
      _
    // Predicated region
    $region22: #{tpu_custom_call.1} parent=1 // pred_check
      _
    $region23: #{tpu_custom_call.1} parent=1 // pred_check_branch
      %904 = sbr.rel (0) target = $region25
    $region24: #{tpu_custom_call.1} parent=1 // pred_region
      %906 = dma.done [#allocation4], 4096
    $region25: #{tpu_custom_call.1} parent=1 // pred_fallthru
      _
    %907 = vsyncpa [#allocation3], 1
    %908 = vsyncpa [#allocation6], 1
    %909 = vsyncpa [#allocation4], 1

</llo_original>
